<compile_context>
chip_gen: v7x
topology: tpu7x:2x2x1
jax: 0.10.0
libtpu: 0.0.40
codegen_flags: <defaults>
</compile_context>

<pallas_src>
import numpy as np
import jax
import jax.numpy as jnp
from jax.experimental import pallas as pl
from jax.experimental.pallas import tpu as pltpu


# ----------------------------------------------------------------------------
# Pallas kernels
# ----------------------------------------------------------------------------
def make_bilstm_stack_kernel(num_layers, H, B, T):
    """Full bidirectional LSTM stack + fused h2s head, VMEM/vreg resident.

    Kernel positional refs:
      lens_ref [B,1] i32, x_ref [T*B, D0] f32,
      per layer: wih [Din, 8H] bf16, b [1, 8H] f32,
                 whh_f [H, 4H] bf16, whh_b [H, 4H] bf16,
      w_out [2H, O] bf16, b_out [1, O] f32,
      y_ref [T*B, O] f32 (output; O lane-padded to 128).
    """

    def kernel(lens_ref, x_ref, *refs):
        y_ref = refs[-1]
        w_out_ref = refs[-3]
        b_out_ref = refs[-2]
        lens = lens_ref[...]                               # [B, 1] int32

        def cell(gate_in, h_prev, c_prev, whh_ref):
            gates = gate_in + jnp.dot(h_prev.astype(jnp.bfloat16), whh_ref[...],
                                      preferred_element_type=jnp.float32)
            i_g = jax.nn.sigmoid(gates[:, 0 * H:1 * H])    # PyTorch gate order
            f_g = jax.nn.sigmoid(gates[:, 1 * H:2 * H])    # i, f, g, o
            g_g = jnp.tanh(gates[:, 2 * H:3 * H])
            o_g = jax.nn.sigmoid(gates[:, 3 * H:4 * H])
            c = f_g * c_prev + i_g * g_g
            h = o_g * jnp.tanh(c)
            return h, c

        x = x_ref[...]                                     # [T*B, D] f32
        for layer in range(num_layers):
            wih_ref, b_ref, whhf_ref, whhb_ref = refs[4 * layer:4 * layer + 4]

            # Hoisted input projection: one MXU matmul covering ALL timesteps
            # and BOTH directions.
            g = (jnp.dot(x.astype(jnp.bfloat16), wih_ref[...],
                         preferred_element_type=jnp.float32)
                 + b_ref[...])                             # [T*B, 8H] f32

            zero = jnp.zeros((B, H), jnp.float32)
            h_f, c_f = zero, zero
            h_b, c_b = zero, zero
            fwd_out = [None] * T
            bwd_out = [None] * T

            # Fully unrolled recurrence (T is small & static): every slice
            # offset is static, the scheduler sees the whole loop, and fwd/bwd
            # directions are interleaved so their MXU/EUP work overlaps.
            # TODO(synk): on v7x the two directions could be split across the
            # 2 TensorCores with a core_parallel grid axis.
            for s in range(T):
                # -- forward direction, time t = s ---------------------------
                t = s
                hf_new, cf_new = cell(g[t * B:(t + 1) * B, 0:4 * H],
                                      h_f, c_f, whhf_ref)
                m_f = lens > t                             # [B, 1] bool
                h_f = jnp.where(m_f, hf_new, h_f)
                c_f = jnp.where(m_f, cf_new, c_f)
                fwd_out[t] = jnp.where(m_f, hf_new, 0.0)

                # -- backward direction, time tb = T-1-s ---------------------
                # Packed-sequence semantics: update/emit only where tb < len,
                # so each sequence's bwd pass starts at its own last valid
                # position with a zero state (pack_padded_sequence behaviour).
                tb = T - 1 - s
                hb_new, cb_new = cell(g[tb * B:(tb + 1) * B, 4 * H:8 * H],
                                      h_b, c_b, whhb_ref)
                m_b = lens > tb
                h_b = jnp.where(m_b, hb_new, h_b)
                c_b = jnp.where(m_b, cb_new, c_b)
                bwd_out[tb] = jnp.where(m_b, hb_new, 0.0)

            # Next-layer input stays a value; no HBM round-trip between layers.
            x = jnp.concatenate(
                [jnp.concatenate(fwd_out, axis=0),
                 jnp.concatenate(bwd_out, axis=0)], axis=1)  # [T*B, 2H]

        # Fused h2s head: single lane-dense store of lane-padded logits.
        y_ref[...] = (jnp.dot(x.astype(jnp.bfloat16), w_out_ref[...],
                              preferred_element_type=jnp.float32)
                      + b_out_ref[...]).astype(y_ref.dtype)

    return kernel


def linear_kernel(x_ref, w_ref, b_ref, o_ref):
    o_ref[...] = (jnp.dot(x_ref[...].astype(jnp.bfloat16), w_ref[...],
                          preferred_element_type=jnp.float32)
                  + b_ref[...]).astype(o_ref.dtype)


# ----------------------------------------------------------------------------
# Pallas wrappers
# ----------------------------------------------------------------------------
def pallas_bilstm_stack(x_flat, lens_col, layers, w_out, b_out):
    """x_flat: [T*B, D] -> lane-padded logits [T*B, O] (fused LSTM stack + h2s)."""
    TB, D = x_flat.shape
    B = lens_col.shape[0]
    T = TB // B
    H = layers[0]["whh_f"].shape[0]
    O = w_out.shape[1]

    args = [lens_col, x_flat]
    in_specs = [pl.BlockSpec((B, 1), lambda i: (0, 0)),        # lengths
                pl.BlockSpec((TB, D), lambda i: (0, 0))]       # x
    for p in layers:
        din = p["w_ih"].shape[0]
        args.extend([p["w_ih"], p["b"], p["whh_f"], p["whh_b"]])
        in_specs.extend([
            pl.BlockSpec((din, 8 * H), lambda i: (0, 0)),      # W_ih fwd|bwd
            pl.BlockSpec((1, 8 * H), lambda i: (0, 0)),        # bias fwd|bwd
            pl.BlockSpec((H, 4 * H), lambda i: (0, 0)),        # W_hh fwd
            pl.BlockSpec((H, 4 * H), lambda i: (0, 0)),        # W_hh bwd
        ])
    args.extend([w_out, b_out.reshape(1, O)])
    in_specs.extend([pl.BlockSpec((2 * H, O), lambda i: (0, 0)),
                     pl.BlockSpec((1, O), lambda i: (0, 0))])

    return pl.pallas_call(
        make_bilstm_stack_kernel(len(layers), H, B, T),
        out_shape=jax.ShapeDtypeStruct((TB, O), jnp.float32),
        grid=(1,),
        in_specs=in_specs,
        out_specs=pl.BlockSpec((TB, O), lambda i: (0, 0)),
        compiler_params=pltpu.CompilerParams(
            dimension_semantics=("arbitrary",)),
    )(*args)


def pallas_linear(x, w, b):
    """x: [N, D] @ w: [D, O] + b: [O] -> [N, O] (bf16 MXU operands)."""
    N, D = x.shape
    O = w.shape[1]
    return pl.pallas_call(
        linear_kernel,
        out_shape=jax.ShapeDtypeStruct((N, O), jnp.float32),
        grid=(1,),
        in_specs=[pl.BlockSpec((N, D), lambda i: (0, 0)),
                  pl.BlockSpec((D, O), lambda i: (0, 0)),
                  pl.BlockSpec((1, O), lambda i: (0, 0))],
        out_specs=pl.BlockSpec((N, O), lambda i: (0, 0)),
    )(x, w, b.reshape(1, O))


# ----------------------------------------------------------------------------
# Model
# ----------------------------------------------------------------------------
class PallasModel:
    """JAX/Pallas port of the PyTorch Model (sentence-level BiLSTM + h2s)."""

    def __init__(self, key, word_dim=32, shidden=64, hidden=128, num_layers=2):
        self.word_dim = word_dim
        self.shidden = shidden
        self.hidden = hidden
        self.num_layers = num_layers

        k = 1.0 / np.sqrt(hidden)
        keys = iter(jax.random.split(key, 64))

        def u(shape, scale):
            return jax.random.uniform(next(keys), shape, jnp.float32,
                                      minval=-scale, maxval=scale)

        # TODO(synk): sentence_encoder is an externally injected module in the
        # PyTorch code; here it is a deterministic mean-pool + linear + tanh
        # stand-in (the linear runs in a Pallas kernel).
        ke = 1.0 / np.sqrt(word_dim)
        self.W_enc = u((word_dim, shidden), ke).astype(jnp.bfloat16)
        self.b_enc = u((shidden,), ke)

        # Bidirectional LSTM parameters (PyTorch gate order i,f,g,o).
        # Input-projection weights for fwd/bwd are concatenated so one matmul
        # produces all gates for both directions.
        self.lstm = []
        for layer in range(num_layers):
            in_dim = shidden if layer == 0 else 2 * hidden
            wih_f = u((in_dim, 4 * hidden), k)
            wih_b = u((in_dim, 4 * hidden), k)
            whh_f = u((hidden, 4 * hidden), k)
            whh_b = u((hidden, 4 * hidden), k)
            b_f = u((1, 4 * hidden), k) + u((1, 4 * hidden), k)  # b_ih + b_hh
            b_b = u((1, 4 * hidden), k) + u((1, 4 * hidden), k)
            self.lstm.append(dict(
                w_ih=jnp.concatenate([wih_f, wih_b], axis=1).astype(jnp.bfloat16),
                b=jnp.concatenate([b_f, b_b], axis=1),
                whh_f=whh_f.astype(jnp.bfloat16),
                whh_b=whh_b.astype(jnp.bfloat16)))

        # h2s: pad O from 2 -> 128 for lane-dense stores; slice back outside.
        kh = 1.0 / np.sqrt(2 * hidden)
        W = u((2 * hidden, 2), kh)
        bb = u((2,), kh)
        self.W_h2s = jnp.zeros((2 * hidden, 128), jnp.bfloat16
                               ).at[:, :2].set(W.astype(jnp.bfloat16))
        self.b_h2s = jnp.zeros((128,), jnp.float32).at[:2].set(bb)

    def forward(self, batch):
        # batch: list of documents; document: list of [num_words, word_dim]
        sentences_per_doc = [len(d) for d in batch]
        all_sents = [s for d in batch for s in d]
        lengths = [s.shape[0] for s in all_sents]
        max_length = max(lengths)

        padded = jnp.stack(
            [jnp.pad(s, ((0, max_length - s.shape[0]), (0, 0)))
             for s in all_sents])                          # [NS, max_len, Wd]

        # sentence encoder stand-in (mean pool + Pallas linear + tanh)
        pooled = jnp.mean(padded, axis=1)                  # [NS, Wd]
        enc = jnp.tanh(pallas_linear(pooled, self.W_enc, self.b_enc))

        # split back into documents
        encoded_docs, idx = [], 0
        for c in sentences_per_doc:
            encoded_docs.append(enc[idx:idx + c])
            idx += c

        doc_sizes = [d.shape[0] for d in encoded_docs]
        max_doc_size = int(np.max(doc_sizes))
        order = np.argsort(doc_sizes)[::-1]
        ordered_sizes = sorted(doc_sizes)[::-1]
        ordered_docs = [encoded_docs[i] for i in order]

        docs_tensor = jnp.stack(
            [jnp.pad(d, ((0, max_doc_size - d.shape[0]), (0, 0)))
             for d in ordered_docs], axis=1)               # [T, B, shidden]
        T, B, _ = docs_tensor.shape
        x_flat = docs_tensor.reshape(T * B, self.shidden)  # time-major flat
        lens_col = jnp.array(ordered_sizes, dtype=jnp.int32).reshape(B, 1)

        # One fused kernel: 2-layer BiLSTM (packed-seq exact) + h2s head.
        logits_flat = pallas_bilstm_stack(x_flat, lens_col, self.lstm,
                                          self.W_h2s, self.b_h2s)
        logits = logits_flat.reshape(T, B, -1)[:, :, :2]   # [T, B, 2]

        # drop last sentence of each doc (segmentation targets), unsort, concat
        doc_logits = [logits[0:L - 1, i, :] for i, L in enumerate(ordered_sizes)]
        inv = np.argsort(order)
        return jnp.concatenate([doc_logits[i] for i in inv], axis=0)  # [N, 2]


# ----------------------------------------------------------------------------
if __name__ == "__main__":
    word_dim = 32
    model = PallasModel(jax.random.PRNGKey(0), word_dim=word_dim,
                        shidden=64, hidden=128, num_layers=2)

    # Deterministic batch: doc0 has 3 sentences, doc1 has 4 sentences.
    sent_lengths = [[5, 7, 3], [4, 8, 2, 6]]
    keys = jax.random.split(jax.random.PRNGKey(0), 16)
    batch, ki = [], 0
    for doc_lens in sent_lengths:
        doc = []
        for L in doc_lens:
            doc.append(jax.random.normal(keys[ki], (L, word_dim),
                                         dtype=jnp.float32))
            ki += 1
        batch.append(doc)

    out = model.forward(batch)
    jax.block_until_ready(out)

    # total output rows = sum(doc_len - 1) = (3-1) + (4-1) = 5, 2 classes
    assert out.shape == (5, 2), out.shape
    assert bool(jnp.all(jnp.isfinite(out)))
    print("KERNEL_OK")
</pallas_src>

<mosaic_0001>
module attributes {stable_mosaic.version = 11 : i64} {
  func.func @linear_kernel(%arg0: i32, %arg1: memref<7x32xf32, #tpu.memory_space<vmem>>, %arg2: memref<32x64xbf16, #tpu.memory_space<vmem>>, %arg3: memref<1x64xf32, #tpu.memory_space<vmem>>, %arg4: memref<7x64xf32, #tpu.memory_space<vmem>>) attributes {dimension_semantics = [#tpu.dimension_semantics<arbitrary>], iteration_bounds = array<i64: 1>, scalar_prefetch = 0 : i64, scratch_operands = 0 : i64, tpu.core_type = #tpu.core_type<tc>, window_params = [{pipeline_mode = #tpu.pipeline_mode<synchronous>, transform_indices = @transform_0, window_bounds = array<i64: 7, 32>}, {pipeline_mode = #tpu.pipeline_mode<synchronous>, transform_indices = @transform_1, window_bounds = array<i64: 32, 64>}, {pipeline_mode = #tpu.pipeline_mode<synchronous>, transform_indices = @transform_2, window_bounds = array<i64: 1, 64>}, {pipeline_mode = #tpu.pipeline_mode<synchronous>, transform_indices = @transform_3, window_bounds = array<i64: 7, 64>}]} {
    %c0 = arith.constant 0 : index
    %c0_0 = arith.constant 0 : index
    %0 = vector.load %arg1[%c0, %c0_0] : memref<7x32xf32, #tpu.memory_space<vmem>>, vector<7x32xf32>
    %1 = arith.truncf %0 : vector<7x32xf32> to vector<7x32xbf16>
    %c0_1 = arith.constant 0 : index
    %c0_2 = arith.constant 0 : index
    %2 = vector.load %arg2[%c0_1, %c0_2] : memref<32x64xbf16, #tpu.memory_space<vmem>>, vector<32x64xbf16>
    %cst = arith.constant dense<0.000000e+00> : vector<7x64xf32>
    %3 = tpu.matmul %1, %2, %cst {dimension_numbers = #tpu.dot_dimension_numbers<[1], [0], [0], [1], [0, 0, 1, 1], [], []>} : vector<7x32xbf16>, vector<32x64xbf16>, vector<7x64xf32> -> vector<7x64xf32>
    %c0_3 = arith.constant 0 : index
    %c0_4 = arith.constant 0 : index
    %4 = vector.load %arg3[%c0_3, %c0_4] : memref<1x64xf32, #tpu.memory_space<vmem>>, vector<1x64xf32>
    %5 = vector.broadcast %4 : vector<1x64xf32> to vector<7x64xf32>
    %6 = arith.addf %3, %5 : vector<7x64xf32>
    %c0_5 = arith.constant 0 : index
    %c0_6 = arith.constant 0 : index
    %7 = vector.load %arg4[%c0_5, %c0_6] : memref<7x64xf32, #tpu.memory_space<vmem>>, vector<7x64xf32>
    tpu.vector_store %arg4[%c0_5, %c0_6], %6 {strides = array<i32>} : memref<7x64xf32, #tpu.memory_space<vmem>>, vector<7x64xf32>,
    return
  }
  func.func @transform_0(%arg0: i32) -> (i32, i32) {
    %c0_i32 = arith.constant 0 : i32
    %c0_i32_0 = arith.constant 0 : i32
    %c0_i32_1 = arith.constant 0 : i32
    return %c0_i32, %c0_i32_0 : i32, i32
  }
  func.func @transform_1(%arg0: i32) -> (i32, i32) {
    %c0_i32 = arith.constant 0 : i32
    %c0_i32_0 = arith.constant 0 : i32
    %c0_i32_1 = arith.constant 0 : i32
    return %c0_i32, %c0_i32_0 : i32, i32
  }
  func.func @transform_2(%arg0: i32) -> (i32, i32) {
    %c0_i32 = arith.constant 0 : i32
    %c0_i32_0 = arith.constant 0 : i32
    %c0_i32_1 = arith.constant 0 : i32
    return %c0_i32, %c0_i32_0 : i32, i32
  }
  func.func @transform_3(%arg0: i32) -> (i32, i32) {
    %c0_i32 = arith.constant 0 : i32
    %c0_i32_0 = arith.constant 0 : i32
    %c0_i32_1 = arith.constant 0 : i32
    return %c0_i32, %c0_i32_0 : i32, i32
  }
}

</mosaic_0001>

<llo_original>
// kernel: tpu_custom_call.1
$region0: #{tpu_custom_call.1}
  #allocation0 [shape = 'u32[]', space=smem, size = 0x4, offset = 0x4, fixed_abs, tag = 'smem constant byte address 0x4 - core index']
  #allocation1 [shape = 'u32[144,128]{1,0:T(1,128)}', space=vmem, size = 0x12000, scoped, tag = 'internal scratch']
  %s0 = inlined_call_operand.hbm [shape: f32[7,32], index: 0, kind: input, shape index: {}]
  %s1 = inlined_call_operand.hbm [shape: bf16[32,64], index: 1, kind: input, shape index: {}]
  %s2 = inlined_call_operand.vmem [shape: f32[1,64], index: 2, kind: input, shape index: {}]
  %s3 = inlined_call_operand.hbm [shape: f32[7,64], index: 3, kind: output, shape index: {}]
  %s4 = sld [smem:[#allocation0]]
  $region30: #{tpu_custom_call.1} parent=0
    _
  %s6 = ssub.s32 1, %s4
  %s7 = scalar_select 0, %s6, %s4
  $region1: #{tpu_custom_call.1} parent=0
    #allocation2 [shape = 'u8[4096]{0}', space=vmem, size = 0x1000, scoped, tag = 'input window, operand 0, single buffered']
    #allocation3 [shape = 's32[1]{0}', space=sflag, size = 0x4, scoped, tag = 'scoped memory for tpu_custom_call.1']
    #allocation4 [shape = 's32[1]{0}', space=sflag, size = 0x4, scoped, tag = 'scoped memory for tpu_custom_call.1']
    #allocation5 [shape = 'u8[8192]{0}', space=vmem, size = 0x2000, scoped, tag = 'input window, operand 1, single buffered']
    #allocation6 [shape = 's32[1]{0}', space=sflag, size = 0x4, scoped, tag = 'scoped memory for tpu_custom_call.1']
    #allocation7 [shape = 'u8[4096]{0}', space=vmem, size = 0x1000, scoped, tag = 'output window, operand 0, single buffered']
    %8 = vsyncpa [#allocation3], 0
    %9 = vsyncpa [#allocation6], 0
    %10 = vsyncpa [#allocation4], 0
    // Predicated region
    $region2: #{tpu_custom_call.1} parent=1 // pred_check
      _
    $region3: #{tpu_custom_call.1} parent=1 // pred_check_branch
      %12 = sbr.rel (0) target = $region5
    $region4: #{tpu_custom_call.1} parent=1 // pred_region
      %s14 = ssub.s32 128, 128
      %15 = vsyncadd [#allocation3], %s14
      %s17 = sshll.u32 [#allocation2], 4
      %s18 = int_to_ptr.vmem [resolvable:$true] %s17
      %20 = dma.hbm_to_vmem [thread:$0]  %s0, 128, %s18, [#allocation3]
    $region5: #{tpu_custom_call.1} parent=1 // pred_fallthru
      _
    // Predicated region
    $region6: #{tpu_custom_call.1} parent=1 // pred_check
      _
    $region7: #{tpu_custom_call.1} parent=1 // pred_check_branch
      %22 = sbr.rel (0) target = $region9
    $region8: #{tpu_custom_call.1} parent=1 // pred_region
      %s24 = ssub.s32 256, 256
      %25 = vsyncadd [#allocation6], %s24
      %s26 = sshll.u32 [#allocation5], 4
      %s27 = int_to_ptr.vmem [resolvable:$true] %s26
      %32 = dma.hbm_to_vmem [thread:$0]  %s1, 256, %s27, [#allocation6], 64, 64, 4
    $region9: #{tpu_custom_call.1} parent=1 // pred_fallthru
      _
    // Predicated region
    $region10: #{tpu_custom_call.1} parent=1 // pred_check
      _
    $region11: #{tpu_custom_call.1} parent=1 // pred_check_branch
      %34 = sbr.rel (0) target = $region13
    $region12: #{tpu_custom_call.1} parent=1 // pred_region
      _
    $region13: #{tpu_custom_call.1} parent=1 // pred_fallthru
      _
    // Predicated region
    $region14: #{tpu_custom_call.1} parent=1 // pred_check
      _
    $region15: #{tpu_custom_call.1} parent=1 // pred_check_branch
      %36 = sbr.rel (0) target = $region17
    $region16: #{tpu_custom_call.1} parent=1 // pred_region
      %37 = dma.done [#allocation3], 128
    $region17: #{tpu_custom_call.1} parent=1 // pred_fallthru
      _
    // Predicated region
    $region18: #{tpu_custom_call.1} parent=1 // pred_check
      _
    $region19: #{tpu_custom_call.1} parent=1 // pred_check_branch
      %39 = sbr.rel (0) target = $region21
    $region20: #{tpu_custom_call.1} parent=1 // pred_region
      %40 = dma.done [#allocation6], 256
    $region21: #{tpu_custom_call.1} parent=1 // pred_fallthru
      _
    %v42 = vld [vmem:[#allocation2] sm:$0x7f]
    %v43 = vpack.c.bf16 %v42, %v42
    %v44 = vld [vmem:[#allocation5] sm:$0xf]
    %v45 = vld [vmem:[#allocation5 + $0x4] sm:$0xf]
    %v46 = vld [vmem:[#allocation5 + $0x8] sm:$0xf]
    %v47 = vld [vmem:[#allocation5 + $0xc] sm:$0xf]
    %v48 = vld [vmem:[%s2] sm:$0x1]
    %v50 = vlaneseq
    %v51 = vshrl.u32 %v50, 7
    %v52 = vsub.s32 0, %v51
    %v53 = vrot.slane %v48, %v52
    %v59 = vunpack.c.l.b16 %v44
    %v60 = vunpack.c.l.b16 %v45
    %v61 = vunpack.c.l.b16 %v46
    %v62 = vunpack.c.l.b16 %v47
    %v63 = vpack.c.b16 %v60, %v59
    %v64 = vpack.c.b16 %v62, %v61
    %vm67 = vcmask 261120
    %v69 = vsel %vm67, %v43, 0
    %71 = vmatprep.subr.bf16.mxu0 0
    %72 = vmatpush1.bf16.msra.mxu0 %v63
    %73 = vmatprep.subr.bf16.mxu0 0
    %74 = vmatpush1.bf16.msra.mxu0 %v64
    %75 = vmatprep.subr.bf16.mxu0 0
    %76 = vmatpush1.bf16.msra.mxu0 0
    %77 = vmatprep.subr.bf16.mxu0 0
    %78 = vmatpush1.bf16.msra.mxu0 0
    %79 = vmatprep.subr.bf16.mxu0 0
    %80 = vmatpush1.bf16.msra.mxu0 0
    %81 = vmatprep.subr.bf16.mxu0 0
    %82 = vmatpush1.bf16.msra.mxu0 0
    %83 = vmatprep.subr.bf16.mxu0 0
    %84 = vmatpush1.bf16.msra.mxu0 0
    %85 = vmatprep.subr.bf16.mxu0 0
    %86 = vmatpush1.bf16.msra.mxu0 0
    %87 = vmatprep.subr.bf16.mxu0 0
    %88 = vmatpush1.bf16.msra.mxu0 0
    %89 = vmatprep.subr.bf16.mxu0 0
    %90 = vmatpush1.bf16.msra.mxu0 0
    %91 = vmatprep.subr.bf16.mxu0 0
    %92 = vmatpush1.bf16.msra.mxu0 0
    %93 = vmatprep.subr.bf16.mxu0 0
    %94 = vmatpush1.bf16.msra.mxu0 0
    %95 = vmatprep.subr.bf16.mxu0 0
    %96 = vmatpush1.bf16.msra.mxu0 0
    %97 = vmatprep.subr.bf16.mxu0 0
    %98 = vmatpush1.bf16.msra.mxu0 0
    %99 = vmatprep.subr.bf16.mxu0 0
    %100 = vmatpush1.bf16.msra.mxu0 0
    %101 = vmatprep.subr.bf16.mxu0 0
    %102 = vmatpush1.bf16.msra.mxu0 0
    %103 = vmatprep.mubr.bf16.mxu0 0
    %104 = vmatmul.mubr.bf16.gmra.mrb[0].mxu0 %v69
    %v105 = vpop.f32.mrb[0].mxu0
    %v106 = vadd.f32 %v53, %v105
    %v107 = vpop.f32.mrb[0].mxu0
    %v108 = vpop.f32.mrb[0].mxu0
    %v109 = vpop.f32.mrb[0].mxu0
    %110 = vdwg.mxu0
    %vm111 = vcmask 522240
    %112 = vst.msk [vmem:[#allocation7] sm:$0x7f] %vm111, %v106
    // Predicated region
    $region22: #{tpu_custom_call.1} parent=1 // pred_check
      _
    $region23: #{tpu_custom_call.1} parent=1 // pred_check_branch
      %114 = sbr.rel (0) target = $region25
    $region24: #{tpu_custom_call.1} parent=1 // pred_region
      %s116 = ssub.s32 128, 128
      %117 = vsyncadd [#allocation4], %s116
      %s119 = sshll.u32 [#allocation7], 4
      %s120 = int_to_ptr.vmem [resolvable:$true] %s119
      %122 = dma.vmem_to_hbm [thread:$0]  %s120, 128, %s3, [#allocation4]
    $region25: #{tpu_custom_call.1} parent=1 // pred_fallthru
      _
    // Predicated region
    $region26: #{tpu_custom_call.1} parent=1 // pred_check
      _
    $region27: #{tpu_custom_call.1} parent=1 // pred_check_branch
      %124 = sbr.rel (0) target = $region29
    $region28: #{tpu_custom_call.1} parent=1 // pred_region
      %125 = dma.done [#allocation4], 128
    $region29: #{tpu_custom_call.1} parent=1 // pred_fallthru
      _
    %126 = vsyncpa [#allocation3], 1
    %127 = vsyncpa [#allocation6], 1
    %128 = vsyncpa [#allocation4], 1

</llo_original>
